<compile_context>
chip_gen: v7x
topology: tpu7x:2x2x1
jax: 0.10.0
libtpu: 0.0.40
codegen_flags: <defaults>
</compile_context>

<pallas_src>
import jax
import jax.numpy as jnp
from jax.experimental import pallas as pl
from jax.experimental.pallas import tpu as pltpu


def _round_up(a, b):
    return (a + b - 1) // b * b


def _vmem_capacity_bytes():
    try:
        return int(pltpu.get_tpu_info().vmem_capacity_bytes)
    except Exception:
        return 64 << 20  # conservative: v7x has 64 MiB per TensorCore


def select_out_tile(d, *, vmem_cap=None, tm=256, out_itemsize=4):
    """Largest out-feature tile (multiple of 128 dividing d) whose
    double-buffered working set fits comfortably in this chip's VMEM."""
    if d % 128 != 0:
        return d  # small / odd d: full extent (block == full array dim)
    if vmem_cap is None:
        vmem_cap = _vmem_capacity_bytes()
    budget = max(vmem_cap - (24 << 20), 24 << 20)  # leave pipeline headroom
    for cand in (2048, 1024, 512, 256, 128):
        if cand <= d and d % cand == 0:
            need = (2 * d * (2 * cand) * 2          # combined weight, 2 bufs, bf16
                    + 2 * tm * d * 2                # x rows, 2 bufs, bf16
                    + 2 * tm * cand * out_itemsize)  # output tile, 2 bufs
            if need <= budget:
                return cand
    return 128


def prepare_attention_projection_params(w1, b1, w2, b2, *, tn=None, out_itemsize=4):
    """One-time (parameter-load time) prep.

    PyTorch Linear weights are (out_features, in_features).  They are
    transposed to (in, out) ONCE here (native untransposed-RHS MXU path, no
    per-step XLU relayout) and block-interleaved along out_features so output
    tile n sees [W1_n | W2_n] as one contiguous (d, 2*tn) block -> a single
    matmul and a single weight DMA stream per grid step.
    """
    d = w1.shape[0]
    if tn is None:
        tn = select_out_tile(d, out_itemsize=out_itemsize)
    nt = d // tn
    w1t = jnp.transpose(w1).reshape(d, nt, tn)   # (in, out) column tiles
    w2t = jnp.transpose(w2).reshape(d, nt, tn)
    wc = jnp.stack([w1t, w2t], axis=2).reshape(d, 2 * d).astype(jnp.bfloat16)
    bc = jnp.stack([b1.reshape(nt, tn), b2.reshape(nt, tn)],
                   axis=1).reshape(1, 2 * d).astype(jnp.float32)
    return wc, bc, tn


def _swiglu_kernel(x_ref, wc_ref, bc_ref, o_ref):
    x = x_ref[...]                                       # [tm, d] bf16
    # One fused [tm, d] @ [d, 2*tn] MXU matmul, f32 accumulation.
    h = jnp.dot(x, wc_ref[...], preferred_element_type=jnp.float32) + bc_ref[...]
    tn = h.shape[-1] // 2
    h1 = h[:, :tn]                                       # W1 half (gate)
    h2 = h[:, tn:]                                       # W2 half (value)
    o_ref[...] = (h1 * jax.nn.sigmoid(h1) * h2).astype(o_ref.dtype)


def attention_projection(x, wc, bc, tn, *, tm=256):
    """x: [..., d_model]; wc/bc/tn from prepare_attention_projection_params."""
    orig_shape = x.shape
    d = orig_shape[-1]
    x2 = x.reshape(-1, d)
    M = x2.shape[0]
    out_dtype = x.dtype
    out_itemsize = jnp.dtype(out_dtype).itemsize
    vmem_cap = _vmem_capacity_bytes()

    # --- tile selection (no host-side padding; ragged last row block is
    #     handled by the cdiv grid and stays row-local) -----------------------
    tm = max(8, min(tm, _round_up(M, 8)))
    n_tiles = d // tn
    m_tiles = pl.cdiv(M, tm)
    if n_tiles == 1 and m_tiles < 2 and M > 8:
        # Keep >=2 blocks along a "parallel" axis so both v7x TensorCores work.
        tm = max(8, _round_up((M + 1) // 2, 8))
        m_tiles = pl.cdiv(M, tm)
    grid = (n_tiles, m_tiles)

    xb = x2.astype(jnp.bfloat16)

    # --- weight pipelining: the weight block only changes on the outer grid
    #     axis; single-buffer it when double-buffering would crowd VMEM
    #     (v7x 64 MiB, large d). ----------------------------------------------
    budget = max(vmem_cap - (24 << 20), 24 << 20)
    w_bytes_2buf = 2 * d * (2 * tn) * 2
    w_buffers = 2 if w_bytes_2buf <= budget // 2 else 1
    wc_spec_kwargs = {} if w_buffers == 2 else {"pipeline_mode": pl.Buffered(1)}

    need = (w_buffers * d * (2 * tn) * 2       # combined weight (bf16)
            + 2 * tm * d * 2                   # x rows (bf16, double-buffered)
            + 2 * tm * tn * out_itemsize       # output tile (double-buffered)
            + 2 * 2 * (2 * tn) * 4)            # bias
    vmem_limit = int(min(max(need + (4 << 20), 32 << 20), int(vmem_cap * 0.9)))

    cost = pl.CostEstimate(
        flops=2 * M * d * (2 * d),             # fused (tm,d)x(d,2tn) matmuls
        transcendentals=M * d,                 # sigmoid
        bytes_accessed=int(M * d * 2 * n_tiles     # x is re-read per N tile
                           + wc.size * 2 + bc.size * 4
                           + M * d * out_itemsize),
    )

    out = pl.pallas_call(
        _swiglu_kernel,
        out_shape=jax.ShapeDtypeStruct((M, d), out_dtype),
        grid=grid,
        in_specs=[
            pl.BlockSpec((tm, d), lambda n, i: (i, 0)),        # x rows (full K)
            pl.BlockSpec((d, 2 * tn), lambda n, i: (0, n),     # [W1_n | W2_n]
                         **wc_spec_kwargs),
            pl.BlockSpec((1, 2 * tn), lambda n, i: (0, n)),    # [b1_n | b2_n]
        ],
        out_specs=pl.BlockSpec((tm, tn), lambda n, i: (i, n)),
        compiler_params=pltpu.CompilerParams(
            dimension_semantics=("parallel", "parallel"),
            vmem_limit_bytes=vmem_limit,
        ),
        cost_estimate=cost,
    )(xb, wc, bc)

    # TODO(synk): for very large d_model (>8K-16K) add a K-reduction grid axis
    # ("arbitrary", last) with an f32 VMEM accumulator instead of keeping the
    # full (tm, d) x (d, 2*tn) contraction resident in one step.
    return out.reshape(orig_shape)


def _reference(x, w1, b1, w2, b2):
    h1 = x @ w1.T + b1
    h2 = x @ w2.T + b2
    return jax.nn.silu(h1) * h2


if __name__ == "__main__":
    d_model = 128
    batch, seq = 2, 8

    key = jax.random.PRNGKey(0)
    kx, k1, k2, k3, k4 = jax.random.split(key, 5)

    # Deterministic parameter init (mimics PyTorch Linear uniform init bounds).
    bound = 1.0 / (d_model ** 0.5)
    w1 = jax.random.uniform(k1, (d_model, d_model), jnp.float32, -bound, bound)
    b1 = jax.random.uniform(k2, (d_model,), jnp.float32, -bound, bound)
    w2 = jax.random.uniform(k3, (d_model, d_model), jnp.float32, -bound, bound)
    b2 = jax.random.uniform(k4, (d_model,), jnp.float32, -bound, bound)

    x = jax.random.normal(kx, (batch, seq, d_model), jnp.float32)

    # One-time parameter prep (transpose + interleave + bf16 cast).
    wc, bc, tn = prepare_attention_projection_params(w1, b1, w2, b2)

    out = jax.block_until_ready(attention_projection(x, wc, bc, tn))

    ref_f32 = _reference(x, w1, b1, w2, b2)
    # Reference computed with bf16-rounded operands (same math the kernel does)
    # for a tight check; f32 reference with bf16-level tolerance for sanity.
    ref_bf16 = _reference(x.astype(jnp.bfloat16).astype(jnp.float32),
                          w1.astype(jnp.bfloat16).astype(jnp.float32), b1,
                          w2.astype(jnp.bfloat16).astype(jnp.float32), b2)

    assert out.shape == ref_f32.shape
    assert jnp.allclose(out, ref_bf16, atol=5e-3, rtol=5e-3), "mismatch vs bf16 reference"
    assert jnp.allclose(out, ref_f32, atol=3e-2, rtol=3e-2), "mismatch vs f32 reference"

    print("KERNEL_OK")
</pallas_src>

<mosaic_0001>
module attributes {stable_mosaic.version = 11 : i64} {
  func.func @_swiglu_kernel(%arg0: i32, %arg1: i32, %arg2: memref<8x128xbf16, #tpu.memory_space<vmem>>, %arg3: memref<128x256xbf16, #tpu.memory_space<vmem>>, %arg4: memref<1x256xf32, #tpu.memory_space<vmem>>, %arg5: memref<8x128xf32, #tpu.memory_space<vmem>>) attributes {dimension_semantics = [#tpu.dimension_semantics<parallel>, #tpu.dimension_semantics<parallel>], iteration_bounds = array<i64: 1, 2>, scalar_prefetch = 0 : i64, scratch_operands = 0 : i64, tpu.core_type = #tpu.core_type<tc>, window_params = [{transform_indices = @transform_0, window_bounds = array<i64: 8, 128>}, {transform_indices = @transform_1, window_bounds = array<i64: 128, 256>}, {transform_indices = @transform_2, window_bounds = array<i64: 1, 256>}, {transform_indices = @transform_3, window_bounds = array<i64: 8, 128>}]} {
    %c0 = arith.constant 0 : index
    %c0_0 = arith.constant 0 : index
    %0 = vector.load %arg2[%c0, %c0_0] : memref<8x128xbf16, #tpu.memory_space<vmem>>, vector<8x128xbf16>
    %c0_1 = arith.constant 0 : index
    %c0_2 = arith.constant 0 : index
    %1 = vector.load %arg3[%c0_1, %c0_2] : memref<128x256xbf16, #tpu.memory_space<vmem>>, vector<128x256xbf16>
    %cst = arith.constant dense<0.000000e+00> : vector<8x256xf32>
    %2 = tpu.matmul %0, %1, %cst {dimension_numbers = #tpu.dot_dimension_numbers<[1], [0], [0], [1], [0, 0, 1, 1], [], []>} : vector<8x128xbf16>, vector<128x256xbf16>, vector<8x256xf32> -> vector<8x256xf32>
    %c0_3 = arith.constant 0 : index
    %c0_4 = arith.constant 0 : index
    %3 = vector.load %arg4[%c0_3, %c0_4] : memref<1x256xf32, #tpu.memory_space<vmem>>, vector<1x256xf32>
    %4 = vector.broadcast %3 : vector<1x256xf32> to vector<8x256xf32>
    %5 = arith.addf %2, %4 : vector<8x256xf32>
    %6 = vector.extract_strided_slice %5 {offsets = [0, 0], sizes = [8, 128], strides = [1, 1]} : vector<8x256xf32> to vector<8x128xf32>
    %7 = vector.extract_strided_slice %5 {offsets = [0, 128], sizes = [8, 128], strides = [1, 1]} : vector<8x256xf32> to vector<8x128xf32>
    %8 = arith.negf %6 : vector<8x128xf32>
    %9 = math.exp %8 : vector<8x128xf32>
    %cst_5 = arith.constant 1.000000e+00 : f32
    %10 = vector.broadcast %cst_5 : f32 to vector<8x128xf32>
    %11 = arith.addf %10, %9 : vector<8x128xf32>
    %12 = arith.divf %10, %11 : vector<8x128xf32>
    %13 = arith.mulf %6, %12 : vector<8x128xf32>
    %14 = arith.mulf %13, %7 : vector<8x128xf32>
    %c0_6 = arith.constant 0 : index
    %c0_7 = arith.constant 0 : index
    %15 = vector.load %arg5[%c0_6, %c0_7] : memref<8x128xf32, #tpu.memory_space<vmem>>, vector<8x128xf32>
    tpu.vector_store %arg5[%c0_6, %c0_7], %14 {strides = array<i32>} : memref<8x128xf32, #tpu.memory_space<vmem>>, vector<8x128xf32>,
    return
  }
  func.func @transform_0(%arg0: i32, %arg1: i32) -> (i32, i32) {
    %c0_i32 = arith.constant 0 : i32
    %c0_i32_0 = arith.constant 0 : i32
    return %arg1, %c0_i32 : i32, i32
  }
  func.func @transform_1(%arg0: i32, %arg1: i32) -> (i32, i32) {
    %c0_i32 = arith.constant 0 : i32
    %c0_i32_0 = arith.constant 0 : i32
    return %c0_i32, %arg0 : i32, i32
  }
  func.func @transform_2(%arg0: i32, %arg1: i32) -> (i32, i32) {
    %c0_i32 = arith.constant 0 : i32
    %c0_i32_0 = arith.constant 0 : i32
    return %c0_i32, %arg0 : i32, i32
  }
  func.func @transform_3(%arg0: i32, %arg1: i32) -> (i32, i32) {
    %c0_i32 = arith.constant 0 : i32
    return %arg1, %arg0 : i32, i32
  }
}

</mosaic_0001>

<llo_original>
// kernel: tpu_custom_call.1
$region0: #{tpu_custom_call.1}
  #allocation0 [shape = 'u32[]', space=smem, size = 0x4, offset = 0x4, fixed_abs, tag = 'smem constant byte address 0x4 - core index']
  #allocation1 [shape = 'u32[144,128]{1,0:T(1,128)}', space=vmem, size = 0x12000, scoped, tag = 'internal scratch']
  %s0 = inlined_call_operand.hbm [shape: bf16[16,128], index: 0, kind: input, shape index: {}]
  %s1 = inlined_call_operand.hbm [shape: bf16[128,256], index: 1, kind: input, shape index: {}]
  %s2 = inlined_call_operand.vmem [shape: f32[1,256], index: 2, kind: input, shape index: {}]
  %s3 = inlined_call_operand.hbm [shape: f32[16,128], index: 3, kind: output, shape index: {}]
  %s4 = sld [smem:[#allocation0]]
  $region53: #{tpu_custom_call.1} parent=0
    _
  %s6 = ssub.s32 1, %s4
  %s7 = scalar_select 0, %s6, %s4
  $region1: #{tpu_custom_call.1} parent=0
    #allocation2 [shape = 'u8[4096]{0}', space=vmem, size = 0x1000, scoped, tag = 'input window, operand 0']
    #allocation3 [shape = 's32[2]{0}', space=sflag, size = 0x8, scoped, tag = 'scoped memory for tpu_custom_call.1']
    #allocation4 [shape = 's32[2]{0}', space=sflag, size = 0x8, scoped, tag = 'scoped memory for tpu_custom_call.1']
    #allocation5 [shape = 'u8[65536]{0}', space=vmem, size = 0x10000, scoped, tag = 'input window, operand 1, single buffered']
    #allocation6 [shape = 's32[1]{0}', space=sflag, size = 0x4, scoped, tag = 'scoped memory for tpu_custom_call.1']
    #allocation7 [shape = 'u8[8192]{0}', space=vmem, size = 0x2000, scoped, tag = 'output window, operand 0']
    %8 = vsyncpa [#allocation3], 0
    %s9 = scalar_lea.sflag [#allocation3], 1
    %10 = vsyncpa %s9, 0
    %11 = vsyncpa [#allocation6], 0
    %12 = vsyncpa [#allocation4], 0
    %s13 = scalar_lea.sflag [#allocation4], 1
    %14 = vsyncpa %s13, 0
    loop: start=0, step=1, limit=4
    $region2: #{tpu_custom_call.1} parent=1 // loop_pre_header
      _
    $region3: #{tpu_custom_call.1} parent=1 // loop_header
      %s16 = sphi 0, %s20
      %p17 = scmp.ge.s32.totalorder %s16, 4
      %s23 = sphi 0, %s35
      %s24 = sphi 0, %s31
      %s25 = sphi 0, %s23
      %s26 = sphi 0, %s24
      %s27 = sphi 0, %s25
      %s28 = sphi 0, %s26
      %s38 = sphi 0, %s40
      %s41 = sphi 0, %s38
      %s42 = sphi 0, %s41
      %s58 = sphi 0, %s42
      %s64 = sphi 0, %s66
      %s67 = sphi 0, %s64
      %s68 = sphi 0, %s67
      %s84 = sphi 0, %s68
      %s90 = sphi 0, %s92
      %s93 = sphi 0, %s90
      %s94 = sphi 0, %s93
      %s110 = sphi 0, %s94
      %s118 = sphi 0, %s120
      %s121 = sphi 0, %s118
      %s122 = sphi 0, %s121
      %s138 = sphi 0, %s122
    $region4: #{tpu_custom_call.1} parent=1 // loop_header_branch
      %19 = sbr.rel (%p17) target = $region8
    $region5: #{tpu_custom_call.1} parent=1 // loop_body
      %s21 = ssub.s32 %s16, 1
      %s22 = ssub.s32 %s16, 2
      %s29 = sadd.s32 1, %s24
      %p30 = scmp.ge.s32.totalorder %s29, 2
      %s31 = scalar_select %p30, 0, %s29
      %s32 = sadd.s32 1, %s23
      %s33 = scalar_select %p30, %s32, %s23
      %p34 = scmp.ge.s32.totalorder %s33, 1
      %s35 = scalar_select %p34, 0, %s33
      %s36 = ssub.s32 %s24, %s31
      %p37 = scmp.eq.s32.totalorder %s36, 0
      %s39 = sadd.s32 %s38, 1
      %s40 = scalar_select %p37, %s38, %s39
      %p43 = pneg %p37
      %p44 = scmp.eq.s32.totalorder %s16, 1
      %p45 = por %p43, %p44
      %p46 = scmp.ne.s32.totalorder %s38, %s41
      %p47 = scmp.eq.s32.totalorder %s16, 0
      %p48 = por %p46, %p47
      %p49 = scmp.ne.s32.totalorder %s38, %s41
      %p50 = scmp.eq.s32.totalorder %s21, 1
      %p51 = por %p49, %p50
      %p52 = scmp.ne.s32.totalorder %s41, %s42
      %p53 = scmp.eq.s32.totalorder %s21, 0
      %p54 = por %p52, %p53
      %p55 = scmp.ne.s32.totalorder %s41, %s42
      %p56 = scmp.eq.s32.totalorder %s22, 1
      %p57 = por %p55, %p56
      %p59 = scmp.ne.s32.totalorder %s42, %s58
      %p60 = scmp.eq.s32.totalorder %s22, 0
      %p61 = por %p59, %p60
      %s62 = ssub.s32 %s23, %s35
      %p63 = scmp.eq.s32.totalorder %s62, 0
      %s65 = sadd.s32 %s64, 1
      %s66 = scalar_select %p63, %s64, %s65
      %p69 = pneg %p63
      %p70 = scmp.eq.s32.totalorder %s16, 1
      %p71 = por %p69, %p70
      %p72 = scmp.ne.s32.totalorder %s64, %s67
      %p73 = scmp.eq.s32.totalorder %s16, 0
      %p74 = por %p72, %p73
      %p75 = scmp.ne.s32.totalorder %s64, %s67
      %p76 = scmp.eq.s32.totalorder %s21, 1
      %p77 = por %p75, %p76
      %p78 = scmp.ne.s32.totalorder %s67, %s68
      %p79 = scmp.eq.s32.totalorder %s21, 0
      %p80 = por %p78, %p79
      %p81 = scmp.ne.s32.totalorder %s67, %s68
      %p82 = scmp.eq.s32.totalorder %s22, 1
      %p83 = por %p81, %p82
      %p85 = scmp.ne.s32.totalorder %s68, %s84
      %p86 = scmp.eq.s32.totalorder %s22, 0
      %p87 = por %p85, %p86
      %s88 = ssub.s32 %s23, %s35
      %p89 = scmp.eq.s32.totalorder %s88, 0
      %s91 = sadd.s32 %s90, 1
      %s92 = scalar_select %p89, %s90, %s91
      %p95 = pneg %p89
      %p96 = scmp.eq.s32.totalorder %s16, 1
      %p97 = por %p95, %p96
      %p98 = scmp.ne.s32.totalorder %s90, %s93
      %p99 = scmp.eq.s32.totalorder %s16, 0
      %p100 = por %p98, %p99
      %p101 = scmp.ne.s32.totalorder %s90, %s93
      %p102 = scmp.eq.s32.totalorder %s21, 1
      %p103 = por %p101, %p102
      %p104 = scmp.ne.s32.totalorder %s93, %s94
      %p105 = scmp.eq.s32.totalorder %s21, 0
      %p106 = por %p104, %p105
      %p107 = scmp.ne.s32.totalorder %s93, %s94
      %p108 = scmp.eq.s32.totalorder %s22, 1
      %p109 = por %p107, %p108
      %p111 = scmp.ne.s32.totalorder %s94, %s110
      %p112 = scmp.eq.s32.totalorder %s22, 0
      %p113 = por %p111, %p112
      %s114 = ssub.s32 %s24, %s31
      %s115 = ssub.s32 %s23, %s35
      %s116 = sor.u32 %s114, %s115
      %p117 = scmp.eq.s32.totalorder %s116, 0
      %s119 = sadd.s32 %s118, 1
      %s120 = scalar_select %p117, %s118, %s119
      %p123 = pneg %p117
      %p124 = scmp.eq.s32.totalorder %s16, 1
      %p125 = por %p123, %p124
      %p126 = scmp.ne.s32.totalorder %s118, %s121
      %p127 = scmp.eq.s32.totalorder %s16, 0
      %p128 = por %p126, %p127
      %p129 = scmp.ne.s32.totalorder %s118, %s121
      %p130 = scmp.eq.s32.totalorder %s21, 1
      %p131 = por %p129, %p130
      %p132 = scmp.ne.s32.totalorder %s121, %s122
      %p133 = scmp.eq.s32.totalorder %s21, 0
      %p134 = por %p132, %p133
      %p135 = scmp.ne.s32.totalorder %s121, %s122
      %p136 = scmp.eq.s32.totalorder %s22, 1
      %p137 = por %p135, %p136
      %p139 = scmp.ne.s32.totalorder %s122, %s138
      %p140 = scmp.eq.s32.totalorder %s22, 0
      %p141 = por %p139, %p140
      %p142 = scmp.le.s32.totalorder 1, %s16
      %p143 = scmp.lt.s32.totalorder %s16, 3
      %p144 = pnand %p142, %p143
      %p145 = pneg %p144
      // Predicated region
      $region9: #{tpu_custom_call.1} parent=5 // pred_check
        _
      $region10: #{tpu_custom_call.1} parent=5 // pred_check_branch
        %147 = sbr.rel (%p144) target = $region12
      $region11: #{tpu_custom_call.1} parent=5 // pred_region
        %s148 = ssub.s32 %s16, 1
        // Predicated region
        $region13: #{tpu_custom_call.1} parent=11 // pred_check
          %p149 = pneg %p80
        $region14: #{tpu_custom_call.1} parent=11 // pred_check_branch
          %151 = sbr.rel (%p149) target = $region16
        $region15: #{tpu_custom_call.1} parent=11 // pred_region
          %s152 = smul.u32 2, %s25
          %s154 = ssub.s32 2048, 2048
          %155 = vsyncadd [#allocation6], %s154
          %s156 = smul.addr %s152, 64
          %s157 = scalar_lea.hbm %s1, %s156
          %s158 = sshll.u32 [#allocation5], 4
          %s159 = int_to_ptr.vmem [resolvable:$true] %s158
          %164 = dma.hbm_to_vmem [thread:$0]  %s157, 2048, %s159, [#allocation6], 128, 128, 8
        $region16: #{tpu_custom_call.1} parent=11 // pred_fallthru
          _
        // Predicated region
        $region17: #{tpu_custom_call.1} parent=11 // pred_check
          %p165 = pneg %p106
        $region18: #{tpu_custom_call.1} parent=11 // pred_check_branch
          %167 = sbr.rel (%p165) target = $region20
        $region19: #{tpu_custom_call.1} parent=11 // pred_region
          %s168 = smul.u32 2, %s25
          %p169 = scmp.lt.s32.totalorder %s168, 1
          %s170 = scalar_select %p169, %s168, 1
          %s171 = scalar_lea.vmem %s2, %s170
          %s172 = smul.u32 2, %s25
        $region20: #{tpu_custom_call.1} parent=11 // pred_fallthru
          _
      $region12: #{tpu_custom_call.1} parent=5 // pred_fallthru
        _
      %p173 = scmp.lt.s32.totalorder %s16, 2
      // Predicated region
      $region21: #{tpu_custom_call.1} parent=5 // pred_check
        %p174 = pneg %p173
      $region22: #{tpu_custom_call.1} parent=5 // pred_check_branch
        %176 = sbr.rel (%p174) target = $region24
      $region23: #{tpu_custom_call.1} parent=5 // pred_region
        // Predicated region
        $region25: #{tpu_custom_call.1} parent=23 // pred_check
          %p177 = pneg %p48
        $region26: #{tpu_custom_call.1} parent=23 // pred_check_branch
          %179 = sbr.rel (%p177) target = $region28
        $region27: #{tpu_custom_call.1} parent=23 // pred_region
          %s180 = sand.u32 %s38, 1
          %s181 = scalar_lea.sflag [#allocation3], %s180
          %s182 = sand.u32 %s38, 1
          %s183 = smul.addr %s182, 4
          %s184 = scalar_lea.vmem [#allocation2], %s183
          %s186 = ssub.s32 64, 64
          %187 = vsyncadd %s181, %s186
          %s188 = smul.addr %s24, 64
          %s189 = scalar_lea.hbm %s0, %s188
          %s191 = sshll.u32 %s184, 4
          %s192 = int_to_ptr.vmem [resolvable:$true] %s191
          %194 = dma.hbm_to_vmem [thread:$0]  %s189, 64, %s192, %s181
        $region28: #{tpu_custom_call.1} parent=23 // pred_fallthru
          _
      $region24: #{tpu_custom_call.1} parent=5 // pred_fallthru
        _
      %p195 = scmp.le.s32.totalorder 1, %s16
      %p196 = scmp.lt.s32.totalorder %s16, 3
      %p197 = pnand %p195, %p196
      %p198 = pneg %p197
      // Predicated region
      $region29: #{tpu_custom_call.1} parent=5 // pred_check
        _
      $region30: #{tpu_custom_call.1} parent=5 // pred_check_branch
        %200 = sbr.rel (%p197) target = $region32
      $region31: #{tpu_custom_call.1} parent=5 // pred_region
        %s201 = ssub.s32 %s16, 1
        %s202 = sand.u32 %s41, 1
        %s203 = scalar_lea.sflag [#allocation3], %s202
        %s204 = sand.u32 %s41, 1
        %s205 = smul.addr %s204, 4
        %s206 = scalar_lea.vmem [#allocation2], %s205
        // Predicated region
        $region33: #{tpu_custom_call.1} parent=31 // pred_check
          %p207 = pneg %p54
        $region34: #{tpu_custom_call.1} parent=31 // pred_check_branch
          %209 = sbr.rel (%p207) target = $region36
        $region35: #{tpu_custom_call.1} parent=31 // pred_region
          %210 = dma.done %s203, 64
        $region36: #{tpu_custom_call.1} parent=31 // pred_fallthru
          _
        // Predicated region
        $region37: #{tpu_custom_call.1} parent=31 // pred_check
          %p211 = pneg %p80
        $region38: #{tpu_custom_call.1} parent=31 // pred_check_branch
          %213 = sbr.rel (%p211) target = $region40
        $region39: #{tpu_custom_call.1} parent=31 // pred_region
          %214 = dma.done [#allocation6], 2048
        $region40: #{tpu_custom_call.1} parent=31 // pred_fallthru
          _
        %s215 = sand.u32 %s41, 1
        %s216 = scalar_lea.sflag [#allocation3], %s215
        %s217 = sand.u32 %s41, 1
        %s218 = smul.addr %s217, 4
        %s219 = scalar_lea.vmem [#allocation2], %s218
        %p220 = pneg %p54
        %p221 = pneg %p51
        %p222 = pneg %p80
        %p223 = pneg %p77
        %s224 = smul.u32 2, %s25
        %p225 = scmp.lt.s32.totalorder %s224, 1
        %s226 = scalar_select %p225, %s224, 1
        %s227 = scalar_lea.vmem %s2, %s226
        %p228 = pneg %p106
        %p229 = pneg %p103
        %p230 = pneg %p134
        %p231 = pneg %p131
        %s232 = sand.u32 %s121, 1
        %s233 = scalar_lea.sflag [#allocation4], %s232
        %s234 = sand.u32 %s121, 1
        %s235 = smul.addr %s234, 8
        %s236 = scalar_lea.vmem [#allocation7], %s235
        %s237 = smul.u32 2, %s25
        %s238 = smul.u32 2, %s25
        %p239 = scmp.lt.s32.totalorder %s238, 1
        %s240 = scalar_select %p239, %s238, 1
        %s241 = scalar_lea.vmem %s2, %s240
        %s242 = smul.u32 2, %s25
        %v244 = vld [vmem:[%s206] sm:$0xf]
        %v245 = vld [vmem:[#allocation5] sm:$0xff]
        %v246 = vld [vmem:[#allocation5 + $0x8] sm:$0xff]
        %v247 = vld [vmem:[#allocation5 + $0x10] sm:$0xff]
        %v248 = vld [vmem:[#allocation5 + $0x18] sm:$0xff]
        %v249 = vld [vmem:[#allocation5 + $0x20] sm:$0xff]
        %v250 = vld [vmem:[#allocation5 + $0x28] sm:$0xff]
        %v251 = vld [vmem:[#allocation5 + $0x30] sm:$0xff]
        %v252 = vld [vmem:[#allocation5 + $0x38] sm:$0xff]
        %v253 = vld [vmem:[#allocation5 + $0x40] sm:$0xff]
        %v254 = vld [vmem:[#allocation5 + $0x48] sm:$0xff]
        %v255 = vld [vmem:[#allocation5 + $0x50] sm:$0xff]
        %v256 = vld [vmem:[#allocation5 + $0x58] sm:$0xff]
        %v257 = vld [vmem:[#allocation5 + $0x60] sm:$0xff]
        %v258 = vld [vmem:[#allocation5 + $0x68] sm:$0xff]
        %v259 = vld [vmem:[#allocation5 + $0x70] sm:$0xff]
        %v260 = vld [vmem:[#allocation5 + $0x78] sm:$0xff]
        %v261 = vld [vmem:[%s241] sm:$0x3]
        %v263 = vlaneseq
        %v264 = vshrl.u32 %v263, 7
        %v265 = vsub.s32 0, %v264
        %v266 = vrot.slane %v261, %v265
        %v267 = vlaneseq
        %v268 = vshrl.u32 %v267, 7
        %v269 = vsub.s32 1, %v268
        %v270 = vrot.slane %v261, %v269
        %v289 = vunpack.c.l.b16 %v245
        %v290 = vunpack.c.h.b16 %v245
        %v291 = vunpack.c.l.b16 %v246
        %v292 = vunpack.c.h.b16 %v246
        %v293 = vunpack.c.l.b16 %v247
        %v294 = vunpack.c.h.b16 %v247
        %v295 = vunpack.c.l.b16 %v248
        %v296 = vunpack.c.h.b16 %v248
        %v297 = vunpack.c.l.b16 %v249
        %v298 = vunpack.c.h.b16 %v249
        %v299 = vunpack.c.l.b16 %v250
        %v300 = vunpack.c.h.b16 %v250
        %v301 = vunpack.c.l.b16 %v251
        %v302 = vunpack.c.h.b16 %v251
        %v303 = vunpack.c.l.b16 %v252
        %v304 = vunpack.c.h.b16 %v252
        %v305 = vunpack.c.l.b16 %v253
        %v306 = vunpack.c.h.b16 %v253
        %v307 = vunpack.c.l.b16 %v254
        %v308 = vunpack.c.h.b16 %v254
        %v309 = vunpack.c.l.b16 %v255
        %v310 = vunpack.c.h.b16 %v255
        %v311 = vunpack.c.l.b16 %v256
        %v312 = vunpack.c.h.b16 %v256
        %v313 = vunpack.c.l.b16 %v257
        %v314 = vunpack.c.h.b16 %v257
        %v315 = vunpack.c.l.b16 %v258
        %v316 = vunpack.c.h.b16 %v258
        %v317 = vunpack.c.l.b16 %v259
        %v318 = vunpack.c.h.b16 %v259
        %v319 = vunpack.c.l.b16 %v260
        %v320 = vunpack.c.h.b16 %v260
        %v321 = vpack.c.b16 %v291, %v289
        %v322 = vpack.c.b16 %v292, %v290
        %v323 = vpack.c.b16 %v295, %v293
        %v324 = vpack.c.b16 %v296, %v294
        %v325 = vpack.c.b16 %v299, %v297
        %v326 = vpack.c.b16 %v300, %v298
        %v327 = vpack.c.b16 %v303, %v301
        %v328 = vpack.c.b16 %v304, %v302
        %v329 = vpack.c.b16 %v307, %v305
        %v330 = vpack.c.b16 %v308, %v306
        %v331 = vpack.c.b16 %v311, %v309
        %v332 = vpack.c.b16 %v312, %v310
        %v333 = vpack.c.b16 %v315, %v313
        %v334 = vpack.c.b16 %v316, %v314
        %v335 = vpack.c.b16 %v319, %v317
        %v336 = vpack.c.b16 %v320, %v318
        %353 = vmatprep.subr.bf16.mxu0 %v322
        %354 = vmatpush1.bf16.msra.mxu0 %v321
        %355 = vmatprep.subr.bf16.mxu0 %v324
        %356 = vmatpush1.bf16.msra.mxu0 %v323
        %357 = vmatprep.subr.bf16.mxu0 %v326
        %358 = vmatpush1.bf16.msra.mxu0 %v325
        %359 = vmatprep.subr.bf16.mxu0 %v328
        %360 = vmatpush1.bf16.msra.mxu0 %v327
        %361 = vmatprep.subr.bf16.mxu0 %v330
        %362 = vmatpush1.bf16.msra.mxu0 %v329
        %363 = vmatprep.subr.bf16.mxu0 %v332
        %364 = vmatpush1.bf16.msra.mxu0 %v331
        %365 = vmatprep.subr.bf16.mxu0 %v334
        %366 = vmatpush1.bf16.msra.mxu0 %v333
        %367 = vmatprep.subr.bf16.mxu0 %v336
        %368 = vmatpush1.bf16.msra.mxu0 %v335
        %369 = vmatprep.subr.bf16.mxu0 0
        %370 = vmatpush1.bf16.msra.mxu0 0
        %371 = vmatprep.subr.bf16.mxu0 0
        %372 = vmatpush1.bf16.msra.mxu0 0
        %373 = vmatprep.subr.bf16.mxu0 0
        %374 = vmatpush1.bf16.msra.mxu0 0
        %375 = vmatprep.subr.bf16.mxu0 0
        %376 = vmatpush1.bf16.msra.mxu0 0
        %377 = vmatprep.subr.bf16.mxu0 0
        %378 = vmatpush1.bf16.msra.mxu0 0
        %379 = vmatprep.subr.bf16.mxu0 0
        %380 = vmatpush1.bf16.msra.mxu0 0
        %381 = vmatprep.subr.bf16.mxu0 0
        %382 = vmatpush1.bf16.msra.mxu0 0
        %383 = vmatprep.subr.bf16.mxu0 0
        %384 = vmatpush1.bf16.msra.mxu0 0
        %385 = vmatprep.mubr.bf16.mxu0 0
        %386 = vmatmul.mubr.bf16.gmra.mrb[0].mxu0 %v244
        %v387 = vpop.f32.mrb[0].mxu0
        %v388 = vadd.f32 %v266, %v387
        %v389 = vpop.f32.mrb[0].mxu0
        %v390 = vadd.f32 %v270, %v389
        %v391 = vpop.f32.mrb[0].mxu0
        %v392 = vpop.f32.mrb[0].mxu0
        %393 = vdwg.mxu0
        %v394 = vxor.u32 %v388, 2147483648
        %v395 = vmul.f32 %v394, 1.442695
        %v396 = vpow.pop %v395
        %v397 = vadd.f32 %v396, 1.0
        %v398 = vrcp.pop %v397
        %v399 = vmul.f32 1.0, %v398
        %v400 = vmul.f32 %v388, %v399
        %v401 = vmul.f32 %v400, %v390
        %402 = vst [vmem:[%s236] sm:$0xff] %v401
        %s403 = sand.u32 %s121, 1
        %s404 = scalar_lea.sflag [#allocation4], %s403
        %s405 = sand.u32 %s121, 1
        %s406 = smul.addr %s405, 8
        %s407 = scalar_lea.vmem [#allocation7], %s406
        // Predicated region
        $region41: #{tpu_custom_call.1} parent=31 // pred_check
          %p408 = pneg %p131
        $region42: #{tpu_custom_call.1} parent=31 // pred_check_branch
          %410 = sbr.rel (%p408) target = $region44
        $region43: #{tpu_custom_call.1} parent=31 // pred_region
          %s412 = ssub.s32 128, 128
          %413 = vsyncadd %s404, %s412
          %s414 = sadd.s32 %s25, %s26
          %s415 = smul.addr %s414, 128
          %s416 = scalar_lea.hbm %s3, %s415
          %s418 = sshll.u32 %s407, 4
          %s419 = int_to_ptr.vmem [resolvable:$true] %s418
          %421 = dma.vmem_to_hbm [thread:$0]  %s419, 128, %s416, %s404
        $region44: #{tpu_custom_call.1} parent=31 // pred_fallthru
          _
      $region32: #{tpu_custom_call.1} parent=5 // pred_fallthru
        _
      %p422 = scmp.le.s32.totalorder 2, %s16
      // Predicated region
      $region45: #{tpu_custom_call.1} parent=5 // pred_check
        %p423 = pneg %p422
      $region46: #{tpu_custom_call.1} parent=5 // pred_check_branch
        %425 = sbr.rel (%p423) target = $region48
      $region47: #{tpu_custom_call.1} parent=5 // pred_region
        %s426 = ssub.s32 %s16, 2
        // Predicated region
        $region49: #{tpu_custom_call.1} parent=47 // pred_check
          %p427 = pneg %p137
        $region50: #{tpu_custom_call.1} parent=47 // pred_check_branch
          %429 = sbr.rel (%p427) target = $region52
        $region51: #{tpu_custom_call.1} parent=47 // pred_region
          %s430 = sand.u32 %s122, 1
          %s431 = scalar_lea.sflag [#allocation4], %s430
          %s432 = sand.u32 %s122, 1
          %s433 = smul.addr %s432, 8
          %s434 = scalar_lea.vmem [#allocation7], %s433
          %435 = dma.done %s431, 128
        $region52: #{tpu_custom_call.1} parent=47 // pred_fallthru
          _
      $region48: #{tpu_custom_call.1} parent=5 // pred_fallthru
        _
    $region6: #{tpu_custom_call.1} parent=1 // loop_footer
      %s20 = sadd.s32 1, %s16
    $region7: #{tpu_custom_call.1} parent=1 // loop_footer_branch
      %15 = sbr.rel target = $region3
    $region8: #{tpu_custom_call.1} parent=1 // loop_exit
      _
    %436 = vsyncpa [#allocation3], 1
    %s437 = scalar_lea.sflag [#allocation3], 1
    %438 = vsyncpa %s437, 1
    %439 = vsyncpa [#allocation6], 1
    %440 = vsyncpa [#allocation4], 1
    %s441 = scalar_lea.sflag [#allocation4], 1
    %442 = vsyncpa %s441, 1

</llo_original>
